<compile_context>
chip_gen: v5e
topology: v5e:2x2
jax: 0.10.0
libtpu: 0.0.40
codegen_flags: <defaults>
</compile_context>

<pallas_src>
import functools
import math

import jax
import jax.numpy as jnp
import numpy as np
from jax.experimental import pallas as pl
from jax.experimental.pallas import tpu as pltpu


def _round_up(x, m):
    return (x + m - 1) // m * m


# ----------------------------------------------------------------------------
# Pallas kernel. One grid step == `BLOCK_N` batch samples:
#   cols : (K_pad, L)        im2col patches (+ ones row for bias), L = BLOCK_N*HW_pad
#   w    : (4*COUT, K_pad)   conv weights (+ bias column), K-padded with zeros
#   peep : (3, COUT, HW_pad) stacked W_ci / W_cf / W_co (NOT tiled by BLOCK_N)
#   cprev: (COUT, L)         previous cell state
#   h, c : (COUT, L)         outputs
# Channels live on sublanes; flattened (sample, spatial) lives on lanes.
# ----------------------------------------------------------------------------
def _convlstm_cell_kernel(cols_ref, w_ref, peep_ref, cprev_ref, h_ref, c_ref, *,
                          COUT, BLOCK_N, activation):
    if activation == "tanh":
        act = jnp.tanh
    else:  # "relu"
        act = lambda x: jnp.maximum(x, 0.0)

    # Single MXU matmul (bias folded in): (4*COUT, K_pad) x (K_pad, L), f32 acc.
    acc = jnp.dot(w_ref[...], cols_ref[...], preferred_element_type=jnp.float32)

    # Gate chunks (i, f, C, o) == torch.chunk along channels -> sublane slices.
    i_c = acc[0 * COUT:1 * COUT, :]
    f_c = acc[1 * COUT:2 * COUT, :]
    g_c = acc[2 * COUT:3 * COUT, :]
    o_c = acc[3 * COUT:4 * COUT, :]

    # Peepholes widened across the folded samples once (hoisted; lane copies).
    def widen(p):  # (COUT, HW_pad) -> (COUT, L)
        return jnp.tile(p, (1, BLOCK_N)) if BLOCK_N > 1 else p

    w_ci = widen(peep_ref[0])
    w_cf = widen(peep_ref[1])
    w_co = widen(peep_ref[2])

    c_prev = cprev_ref[...]                                # (COUT, L) f32

    input_gate = jax.nn.sigmoid(i_c + w_ci * c_prev)
    forget_gate = jax.nn.sigmoid(f_c + w_cf * c_prev)
    c_new = forget_gate * c_prev + input_gate * act(g_c)
    output_gate = jax.nn.sigmoid(o_c + w_co * c_new)
    h_new = output_gate * act(c_new)

    h_ref[...] = h_new.astype(h_ref.dtype)
    c_ref[...] = c_new.astype(c_ref.dtype)


def _pick_block_n(N, K_pad, HW_pad, c_out, mxu_bytes, budget_bytes):
    """Samples folded per grid step, sized from a per-step VMEM budget
    (double-buffered inputs/outputs + f32 intermediates), not a fixed cap."""
    per_sample = (K_pad * HW_pad * mxu_bytes * 2          # cols (double-buffered)
                  + c_out * HW_pad * 4 * 2                # c_prev
                  + 2 * c_out * HW_pad * 4 * 2            # h / c outputs
                  + 16 * c_out * HW_pad * 4)              # in-kernel f32 temporaries
    fixed = (4 * c_out * K_pad * mxu_bytes * 2            # weights (+bias col)
             + 3 * c_out * HW_pad * 4 * 2)                # peepholes
    avail = max(budget_bytes - fixed, per_sample)
    block_n = int(max(1, min(N, avail // per_sample)))
    return block_n


# ----------------------------------------------------------------------------
# Wrapper: NCHW glue (concat, pad, im2col, bias fold, layout fold) + pallas_call.
# ----------------------------------------------------------------------------
def conv_lstm_cell_forward(X, H_prev, C_prev, params, *, activation="tanh",
                           mxu_dtype=jnp.bfloat16, vmem_budget_bytes=16 << 20):
    """X: (N, C_in, H, W); H_prev, C_prev: (N, C_out, H, W) -> (H, C) in NCHW."""
    N, c_in, FH, FW = X.shape
    c_out = H_prev.shape[1]
    conv_w = params["conv_w"]                      # (4*C_out, C_in+C_out, KH, KW)
    conv_b = params["conv_b"]                      # (4*C_out,)
    KH, KW = conv_w.shape[2], conv_w.shape[3]
    pad = params["padding"]
    CIN = c_in + c_out
    HW = FH * FW
    K = CIN * KH * KW

    # Peepholes / C_prev are elementwise with the conv output => 'same' conv.
    assert 2 * pad == KH - 1 and 2 * pad == KW - 1, (
        "ConvLSTMCell requires 'same' convolution: 2*padding == kernel_size - 1")

    mxu_bytes = jnp.dtype(mxu_dtype).itemsize
    HW_pad = _round_up(HW, 128)                    # lane-dense stores
    K_pad = _round_up(K + 1, 128)                  # +1 ones-row for folded bias

    block_n = _pick_block_n(N, K_pad, HW_pad, c_out, mxu_bytes, vmem_budget_bytes)
    G = -(-N // block_n)
    N_pad = G * block_n
    L = block_n * HW_pad

    # --- im2col in the wrapper (XLA handles this cheaply at these sizes) ---
    cat = jnp.concatenate([X, H_prev], axis=1)                         # (N, CIN, H, W)
    catp = jnp.pad(cat, ((0, 0), (0, 0), (pad, pad), (pad, pad)))
    taps = [catp[:, :, dy:dy + FH, dx:dx + FW]
            for dy in range(KH) for dx in range(KW)]                   # each (N,CIN,H,W)
    patches = jnp.stack(taps, axis=2)                                  # (N, CIN, KH*KW, H, W)
    cols = patches.reshape(N, K, HW)                                   # K order: (cin, dy, dx)
    ones = jnp.ones((N, 1, HW), cols.dtype)                            # bias row
    cols = jnp.concatenate([cols, ones], axis=1)                       # (N, K+1, HW)
    cols = jnp.pad(cols, ((0, N_pad - N), (0, K_pad - (K + 1)), (0, HW_pad - HW)))
    # Fold block_n samples onto the lane dimension (sample-major lanes).
    cols = (cols.reshape(G, block_n, K_pad, HW_pad)
            .transpose(0, 2, 1, 3).reshape(G, K_pad, L).astype(mxu_dtype))

    # Weights flattened with the same K ordering, bias column appended, K-padded.
    w2d = conv_w.reshape(4 * c_out, K)
    w2d = jnp.concatenate([w2d, conv_b.reshape(4 * c_out, 1)], axis=1)
    w2d = jnp.pad(w2d, ((0, 0), (0, K_pad - (K + 1)))).astype(mxu_dtype)

    # Stacked peepholes, passed once (widened across block_n inside the kernel).
    peep = jnp.stack([params["W_ci"], params["W_cf"], params["W_co"]], axis=0)
    peep = peep.reshape(3, c_out, HW)
    peep = jnp.pad(peep, ((0, 0), (0, 0), (0, HW_pad - HW))).astype(jnp.float32)

    cprev = C_prev.reshape(N, c_out, HW)
    cprev = jnp.pad(cprev, ((0, N_pad - N), (0, 0), (0, HW_pad - HW)))
    cprev = (cprev.reshape(G, block_n, c_out, HW_pad)
             .transpose(0, 2, 1, 3).reshape(G, c_out, L).astype(jnp.float32))

    kernel = functools.partial(_convlstm_cell_kernel, COUT=c_out, BLOCK_N=block_n,
                               activation=activation)

    grid_spec = pltpu.PrefetchScalarGridSpec(
        num_scalar_prefetch=0,
        grid=(G,),
        in_specs=[
            pl.BlockSpec((None, K_pad, L), lambda g: (g, 0, 0)),       # im2col cols
            pl.BlockSpec((4 * c_out, K_pad), lambda g: (0, 0)),        # weights (+bias)
            pl.BlockSpec((3, c_out, HW_pad), lambda g: (0, 0, 0)),     # peepholes
            pl.BlockSpec((None, c_out, L), lambda g: (g, 0, 0)),       # C_prev
        ],
        out_specs=[
            pl.BlockSpec((None, c_out, L), lambda g: (g, 0, 0)),       # H_new
            pl.BlockSpec((None, c_out, L), lambda g: (g, 0, 0)),       # C_new
        ],
    )

    h_g, c_g = pl.pallas_call(
        kernel,
        out_shape=(jax.ShapeDtypeStruct((G, c_out, L), jnp.float32),
                   jax.ShapeDtypeStruct((G, c_out, L), jnp.float32)),
        grid_spec=grid_spec,
        input_output_aliases={3: 1},                                   # C_prev -> C_new buffer
        compiler_params=pltpu.CompilerParams(dimension_semantics=("parallel",)),
    )(cols, w2d, peep, cprev)

    def unfold(y):  # (G, COUT, block_n*HW_pad) -> (N, COUT, H, W)
        y = (y.reshape(G, c_out, block_n, HW_pad)
             .transpose(0, 2, 1, 3)
             .reshape(N_pad, c_out, HW_pad))
        return y[:N, :, :HW].reshape(N, c_out, FH, FW)

    return unfold(h_g), unfold(c_g)


# ----------------------------------------------------------------------------
# Plain-JAX reference (mirrors the PyTorch forward exactly) for validation.
# ----------------------------------------------------------------------------
def conv_lstm_cell_reference(X, H_prev, C_prev, params, *, activation="tanh"):
    act = jnp.tanh if activation == "tanh" else jax.nn.relu
    pad = params["padding"]
    cat = jnp.concatenate([X, H_prev], axis=1)
    conv = jax.lax.conv_general_dilated(
        cat, params["conv_w"], window_strides=(1, 1),
        padding=[(pad, pad), (pad, pad)],
        dimension_numbers=("NCHW", "OIHW", "NCHW"))
    conv = conv + params["conv_b"][None, :, None, None]
    i_c, f_c, g_c, o_c = jnp.split(conv, 4, axis=1)
    ig = jax.nn.sigmoid(i_c + params["W_ci"][None] * C_prev)
    fg = jax.nn.sigmoid(f_c + params["W_cf"][None] * C_prev)
    C = fg * C_prev + ig * act(g_c)
    og = jax.nn.sigmoid(o_c + params["W_co"][None] * C)
    H = og * act(C)
    return H, C


# ----------------------------------------------------------------------------
# Deterministic parameter init (xavier_uniform for >1-D params, zeros for bias,
# matching ConvLSTMCell.reset_parameters).
# ----------------------------------------------------------------------------
def init_params(key, in_channels, out_channels, kernel_size, padding, frame_size):
    kh, kw = kernel_size
    cin = in_channels + out_channels
    k_w, k_ci, k_cf, k_co = jax.random.split(key, 4)

    def xavier(k, shape, fan_in, fan_out):
        bound = math.sqrt(6.0 / (fan_in + fan_out))
        return jax.random.uniform(k, shape, jnp.float32, -bound, bound)

    conv_w = xavier(k_w, (4 * out_channels, cin, kh, kw),
                    fan_in=cin * kh * kw, fan_out=4 * out_channels * kh * kw)
    conv_b = jnp.zeros((4 * out_channels,), jnp.float32)
    fh, fw = frame_size
    # torch fan calc for (C_out, H, W): fan_in = H*W, fan_out = C_out*W
    W_ci = xavier(k_ci, (out_channels, fh, fw), fan_in=fh * fw, fan_out=out_channels * fw)
    W_cf = xavier(k_cf, (out_channels, fh, fw), fan_in=fh * fw, fan_out=out_channels * fw)
    W_co = xavier(k_co, (out_channels, fh, fw), fan_in=fh * fw, fan_out=out_channels * fw)
    return dict(conv_w=conv_w, conv_b=conv_b, W_ci=W_ci, W_cf=W_cf, W_co=W_co,
                padding=padding)


if __name__ == "__main__":
    batch = 2
    in_channels = 4
    out_channels = 8
    kernel_size = (3, 3)
    padding = 1
    frame_size = (16, 16)
    activation = "tanh"

    key = jax.random.PRNGKey(0)
    k_p, k_x, k_h, k_c = jax.random.split(key, 4)
    params = init_params(k_p, in_channels, out_channels, kernel_size, padding, frame_size)

    X = jax.random.normal(k_x, (batch, in_channels, *frame_size), jnp.float32)
    H_prev = jax.random.normal(k_h, (batch, out_channels, *frame_size), jnp.float32)
    C_prev = jax.random.normal(k_c, (batch, out_channels, *frame_size), jnp.float32)

    H_ref, C_ref = conv_lstm_cell_reference(X, H_prev, C_prev, params, activation=activation)

    # f32 MXU path: tight parity with the reference.
    H32, C32 = conv_lstm_cell_forward(X, H_prev, C_prev, params,
                                      activation=activation, mxu_dtype=jnp.float32)
    jax.block_until_ready((H32, C32))
    np.testing.assert_allclose(np.asarray(H32), np.asarray(H_ref), rtol=1e-4, atol=1e-4)
    np.testing.assert_allclose(np.asarray(C32), np.asarray(C_ref), rtol=1e-4, atol=1e-4)

    # Default fast path: bf16 MXU operands, f32 accumulation + f32 gate math.
    H_out, C_out = conv_lstm_cell_forward(X, H_prev, C_prev, params, activation=activation)
    jax.block_until_ready((H_out, C_out))
    np.testing.assert_allclose(np.asarray(H_out), np.asarray(H_ref), rtol=3e-2, atol=3e-2)
    np.testing.assert_allclose(np.asarray(C_out), np.asarray(C_ref), rtol=3e-2, atol=3e-2)

    print("KERNEL_OK")
</pallas_src>

<mosaic_0001>
module attributes {stable_mosaic.version = 11 : i64} {
  func.func @_convlstm_cell_kernel(%arg0: i32, %arg1: memref<1x128x512xf32, #tpu.memory_space<vmem>>, %arg2: memref<32x128xf32, #tpu.memory_space<vmem>>, %arg3: memref<3x8x256xf32, #tpu.memory_space<vmem>>, %arg4: memref<1x8x512xf32, #tpu.memory_space<vmem>>, %arg5: memref<1x8x512xf32, #tpu.memory_space<vmem>>, %arg6: memref<1x8x512xf32, #tpu.memory_space<vmem>>) attributes {dimension_semantics = [#tpu.dimension_semantics<parallel>], iteration_bounds = array<i64: 1>, scalar_prefetch = 0 : i64, scratch_operands = 0 : i64, tpu.core_type = #tpu.core_type<tc>, window_params = [{transform_indices = @transform_0, window_bounds = array<i64: 1, 128, 512>}, {pipeline_mode = #tpu.pipeline_mode<synchronous>, transform_indices = @transform_1, window_bounds = array<i64: 32, 128>}, {pipeline_mode = #tpu.pipeline_mode<synchronous>, transform_indices = @transform_2, window_bounds = array<i64: 3, 8, 256>}, {transform_indices = @transform_3, window_bounds = array<i64: 1, 8, 512>}, {transform_indices = @transform_4, window_bounds = array<i64: 1, 8, 512>}, {transform_indices = @transform_5, window_bounds = array<i64: 1, 8, 512>}]} {
    %c0 = arith.constant 0 : index
    %c0_0 = arith.constant 0 : index
    %0 = vector.load %arg2[%c0, %c0_0] : memref<32x128xf32, #tpu.memory_space<vmem>>, vector<32x128xf32>
    %c0_1 = arith.constant 0 : index
    %c0_2 = arith.constant 0 : index
    %c0_3 = arith.constant 0 : index
    %1 = vector.load %arg1[%c0_1, %c0_2, %c0_3] : memref<1x128x512xf32, #tpu.memory_space<vmem>>, vector<1x128x512xf32>
    %2 = vector.shape_cast %1 : vector<1x128x512xf32> to vector<128x512xf32>
    %cst = arith.constant dense<0.000000e+00> : vector<32x512xf32>
    %3 = tpu.matmul %0, %2, %cst {dimension_numbers = #tpu.dot_dimension_numbers<[1], [0], [0], [1], [0, 0, 1, 1], [], []>} : vector<32x128xf32>, vector<128x512xf32>, vector<32x512xf32> -> vector<32x512xf32>
    %4 = vector.extract_strided_slice %3 {offsets = [0, 0], sizes = [8, 512], strides = [1, 1]} : vector<32x512xf32> to vector<8x512xf32>
    %5 = vector.extract_strided_slice %3 {offsets = [8, 0], sizes = [8, 512], strides = [1, 1]} : vector<32x512xf32> to vector<8x512xf32>
    %6 = vector.extract_strided_slice %3 {offsets = [16, 0], sizes = [8, 512], strides = [1, 1]} : vector<32x512xf32> to vector<8x512xf32>
    %7 = vector.extract_strided_slice %3 {offsets = [24, 0], sizes = [8, 512], strides = [1, 1]} : vector<32x512xf32> to vector<8x512xf32>
    %c0_4 = arith.constant 0 : index
    %c0_5 = arith.constant 0 : index
    %c0_6 = arith.constant 0 : index
    %8 = vector.load %arg3[%c0_4, %c0_5, %c0_6] : memref<3x8x256xf32, #tpu.memory_space<vmem>>, vector<1x8x256xf32>
    %9 = vector.shape_cast %8 : vector<1x8x256xf32> to vector<8x256xf32>
    %10 = tpu.concatenate %9, %9 in 1 : vector<8x256xf32>, vector<8x256xf32> -> vector<8x512xf32>
    %c1 = arith.constant 1 : index
    %c0_7 = arith.constant 0 : index
    %c0_8 = arith.constant 0 : index
    %11 = vector.load %arg3[%c1, %c0_7, %c0_8] : memref<3x8x256xf32, #tpu.memory_space<vmem>>, vector<1x8x256xf32>
    %12 = vector.shape_cast %11 : vector<1x8x256xf32> to vector<8x256xf32>
    %13 = tpu.concatenate %12, %12 in 1 : vector<8x256xf32>, vector<8x256xf32> -> vector<8x512xf32>
    %c2 = arith.constant 2 : index
    %c0_9 = arith.constant 0 : index
    %c0_10 = arith.constant 0 : index
    %14 = vector.load %arg3[%c2, %c0_9, %c0_10] : memref<3x8x256xf32, #tpu.memory_space<vmem>>, vector<1x8x256xf32>
    %15 = vector.shape_cast %14 : vector<1x8x256xf32> to vector<8x256xf32>
    %16 = tpu.concatenate %15, %15 in 1 : vector<8x256xf32>, vector<8x256xf32> -> vector<8x512xf32>
    %c0_11 = arith.constant 0 : index
    %c0_12 = arith.constant 0 : index
    %c0_13 = arith.constant 0 : index
    %17 = vector.load %arg4[%c0_11, %c0_12, %c0_13] : memref<1x8x512xf32, #tpu.memory_space<vmem>>, vector<1x8x512xf32>
    %18 = vector.shape_cast %17 : vector<1x8x512xf32> to vector<8x512xf32>
    %19 = arith.mulf %10, %18 : vector<8x512xf32>
    %20 = arith.addf %4, %19 : vector<8x512xf32>
    %21 = arith.negf %20 : vector<8x512xf32>
    %22 = math.exp %21 : vector<8x512xf32>
    %cst_14 = arith.constant 1.000000e+00 : f32
    %23 = vector.broadcast %cst_14 : f32 to vector<8x512xf32>
    %24 = arith.addf %23, %22 : vector<8x512xf32>
    %25 = arith.divf %23, %24 : vector<8x512xf32>
    %26 = arith.mulf %13, %18 : vector<8x512xf32>
    %27 = arith.addf %5, %26 : vector<8x512xf32>
    %28 = arith.negf %27 : vector<8x512xf32>
    %29 = math.exp %28 : vector<8x512xf32>
    %cst_15 = arith.constant 1.000000e+00 : f32
    %30 = vector.broadcast %cst_15 : f32 to vector<8x512xf32>
    %31 = arith.addf %30, %29 : vector<8x512xf32>
    %32 = arith.divf %30, %31 : vector<8x512xf32>
    %33 = arith.mulf %32, %18 : vector<8x512xf32>
    %34 = math.tanh %6 : vector<8x512xf32>
    %35 = arith.mulf %25, %34 : vector<8x512xf32>
    %36 = arith.addf %33, %35 : vector<8x512xf32>
    %37 = arith.mulf %16, %36 : vector<8x512xf32>
    %38 = arith.addf %7, %37 : vector<8x512xf32>
    %39 = arith.negf %38 : vector<8x512xf32>
    %40 = math.exp %39 : vector<8x512xf32>
    %cst_16 = arith.constant 1.000000e+00 : f32
    %41 = vector.broadcast %cst_16 : f32 to vector<8x512xf32>
    %42 = arith.addf %41, %40 : vector<8x512xf32>
    %43 = arith.divf %41, %42 : vector<8x512xf32>
    %44 = math.tanh %36 : vector<8x512xf32>
    %45 = arith.mulf %43, %44 : vector<8x512xf32>
    %c0_17 = arith.constant 0 : index
    %c0_18 = arith.constant 0 : index
    %c0_19 = arith.constant 0 : index
    %46 = vector.load %arg5[%c0_17, %c0_18, %c0_19] : memref<1x8x512xf32, #tpu.memory_space<vmem>>, vector<1x8x512xf32>
    %47 = vector.shape_cast %46 : vector<1x8x512xf32> to vector<8x512xf32>
    %48 = vector.shape_cast %45 : vector<8x512xf32> to vector<1x8x512xf32>
    tpu.vector_store %arg5[%c0_17, %c0_18, %c0_19], %48 {strides = array<i32>} : memref<1x8x512xf32, #tpu.memory_space<vmem>>, vector<1x8x512xf32>,
    %c0_20 = arith.constant 0 : index
    %c0_21 = arith.constant 0 : index
    %c0_22 = arith.constant 0 : index
    %49 = vector.load %arg6[%c0_20, %c0_21, %c0_22] : memref<1x8x512xf32, #tpu.memory_space<vmem>>, vector<1x8x512xf32>
    %50 = vector.shape_cast %49 : vector<1x8x512xf32> to vector<8x512xf32>
    %51 = vector.shape_cast %36 : vector<8x512xf32> to vector<1x8x512xf32>
    tpu.vector_store %arg6[%c0_20, %c0_21, %c0_22], %51 {strides = array<i32>} : memref<1x8x512xf32, #tpu.memory_space<vmem>>, vector<1x8x512xf32>,
    return
  }
  func.func @transform_0(%arg0: i32) -> (i32, i32, i32) {
    %c0_i32 = arith.constant 0 : i32
    %c0_i32_0 = arith.constant 0 : i32
    %c0_i32_1 = arith.constant 0 : i32
    return %arg0, %c0_i32, %c0_i32_0 : i32, i32, i32
  }
  func.func @transform_1(%arg0: i32) -> (i32, i32) {
    %c0_i32 = arith.constant 0 : i32
    %c0_i32_0 = arith.constant 0 : i32
    %c0_i32_1 = arith.constant 0 : i32
    return %c0_i32, %c0_i32_0 : i32, i32
  }
  func.func @transform_2(%arg0: i32) -> (i32, i32, i32) {
    %c0_i32 = arith.constant 0 : i32
    %c0_i32_0 = arith.constant 0 : i32
    %c0_i32_1 = arith.constant 0 : i32
    %c0_i32_2 = arith.constant 0 : i32
    return %c0_i32, %c0_i32_0, %c0_i32_1 : i32, i32, i32
  }
  func.func @transform_3(%arg0: i32) -> (i32, i32, i32) {
    %c0_i32 = arith.constant 0 : i32
    %c0_i32_0 = arith.constant 0 : i32
    %c0_i32_1 = arith.constant 0 : i32
    return %arg0, %c0_i32, %c0_i32_0 : i32, i32, i32
  }
  func.func @transform_4(%arg0: i32) -> (i32, i32, i32) {
    %c0_i32 = arith.constant 0 : i32
    %c0_i32_0 = arith.constant 0 : i32
    %c0_i32_1 = arith.constant 0 : i32
    return %arg0, %c0_i32, %c0_i32_0 : i32, i32, i32
  }
  func.func @transform_5(%arg0: i32) -> (i32, i32, i32) {
    %c0_i32 = arith.constant 0 : i32
    %c0_i32_0 = arith.constant 0 : i32
    %c0_i32_1 = arith.constant 0 : i32
    return %arg0, %c0_i32, %c0_i32_0 : i32, i32, i32
  }
}

</mosaic_0001>

<llo_original>
// kernel: tpu_custom_call.1
$region0: #{tpu_custom_call.1}
  #allocation0 [shape = 'u32[]', space=smem, size = 0x4, offset = 0x4, fixed_abs, tag = 'smem constant byte address 0x4 - core index']
  #allocation1 [shape = 'u32[72,128]{1,0:T(1,128)}', space=vmem, size = 0x9000, scoped, tag = 'internal scratch']
  %s0 = inlined_call_operand.hbm [shape: f32[1,128,512], index: 0, kind: input, shape index: {}]
  %s1 = inlined_call_operand.hbm [shape: f32[32,128], index: 1, kind: input, shape index: {}]
  %s2 = inlined_call_operand.vmem [shape: f32[3,8,256], index: 2, kind: input, shape index: {}]
  %s3 = inlined_call_operand.hbm [shape: f32[1,8,512], index: 3, kind: input, shape index: {}, may-alias: {3,5}]
  %s4 = inlined_call_operand.hbm [shape: f32[1,8,512], index: 4, kind: output, shape index: {0}]
  %s5 = inlined_call_operand.hbm [shape: f32[1,8,512], index: 5, kind: output, shape index: {1}, may-alias: {3,5}]
  %6 = xla_tuple %s4, %s5
  %s7 = sld [smem:[#allocation0]]
  $region46: #{tpu_custom_call.1} parent=0
    _
  %s9 = ssub.s32 1, %s7
  %s10 = scalar_select 0, %s9, %s7
  $region1: #{tpu_custom_call.1} parent=0
    #allocation2 [shape = 'u8[262144]{0}', space=vmem, size = 0x40000, scoped, tag = 'input window, operand 0, single buffered']
    #allocation3 [shape = 's32[1]{0}', space=sflag, size = 0x4, scoped, tag = 'scoped memory for tpu_custom_call.1']
    #allocation4 [shape = 's32[1]{0}', space=sflag, size = 0x4, scoped, tag = 'scoped memory for tpu_custom_call.1']
    #allocation5 [shape = 'u8[16384]{0}', space=vmem, size = 0x4000, scoped, tag = 'input window, operand 1, single buffered']
    #allocation6 [shape = 's32[1]{0}', space=sflag, size = 0x4, scoped, tag = 'scoped memory for tpu_custom_call.1']
    #allocation7 [shape = 'u8[16384]{0}', space=vmem, size = 0x4000, scoped, tag = 'input window, operand 3, single buffered']
    #allocation8 [shape = 'u8[16384]{0}', space=vmem, size = 0x4000, scoped, tag = 'output window, operand 0, single buffered']
    #allocation9 [shape = 'u8[16384]{0}', space=vmem, size = 0x4000, scoped, tag = 'output window, operand 1, single buffered']
    #allocation10 [shape = 's32[1]{0}', space=sflag, size = 0x4, scoped, tag = 'scoped memory for tpu_custom_call.1']
    %11 = vsyncpa [#allocation3], 0
    %12 = vsyncpa [#allocation6], 0
    %13 = vsyncpa [#allocation4], 0
    %14 = vsyncpa [#allocation10], 0
    // Predicated region
    $region2: #{tpu_custom_call.1} parent=1 // pred_check
      _
    $region3: #{tpu_custom_call.1} parent=1 // pred_check_branch
      %16 = sbr.rel (0) target = $region5
    $region4: #{tpu_custom_call.1} parent=1 // pred_region
      %18 = vsyncadd [#allocation3], 0
      %s19 = sshll.u32 %s0, 4
      %s20 = int_to_ptr.hbm [resolvable:$true] %s19
      %s21 = sshll.u32 [#allocation2], 4
      %s22 = int_to_ptr.vmem [resolvable:$true] %s21
      %27 = dma.hbm_to_vmem [thread:$0]  %s20, 8192, %s22, [#allocation3], 512, 512, 32
    $region5: #{tpu_custom_call.1} parent=1 // pred_fallthru
      _
    // Predicated region
    $region6: #{tpu_custom_call.1} parent=1 // pred_check
      _
    $region7: #{tpu_custom_call.1} parent=1 // pred_check_branch
      %29 = sbr.rel (0) target = $region9
    $region8: #{tpu_custom_call.1} parent=1 // pred_region
      %31 = vsyncadd [#allocation6], 0
      %s32 = sshll.u32 %s1, 4
      %s33 = int_to_ptr.hbm [resolvable:$true] %s32
      %s34 = sshll.u32 [#allocation5], 4
      %s35 = int_to_ptr.vmem [resolvable:$true] %s34
      %40 = dma.hbm_to_vmem [thread:$0]  %s33, 512, %s35, [#allocation6], 128, 128, 8
    $region9: #{tpu_custom_call.1} parent=1 // pred_fallthru
      _
    // Predicated region
    $region10: #{tpu_custom_call.1} parent=1 // pred_check
      _
    $region11: #{tpu_custom_call.1} parent=1 // pred_check_branch
      %42 = sbr.rel (0) target = $region13
    $region12: #{tpu_custom_call.1} parent=1 // pred_region
      _
    $region13: #{tpu_custom_call.1} parent=1 // pred_fallthru
      _
    // Predicated region
    $region14: #{tpu_custom_call.1} parent=1 // pred_check
      _
    $region15: #{tpu_custom_call.1} parent=1 // pred_check_branch
      %44 = sbr.rel (0) target = $region17
    $region16: #{tpu_custom_call.1} parent=1 // pred_region
      %46 = vsyncadd [#allocation6], 0
      %s48 = sshll.u32 %s3, 4
      %s49 = int_to_ptr.hbm [resolvable:$true] %s48
      %s50 = sshll.u32 [#allocation7], 4
      %s51 = int_to_ptr.vmem [resolvable:$true] %s50
      %53 = dma.hbm_to_vmem [thread:$0]  %s49, 512, %s51, [#allocation6]
    $region17: #{tpu_custom_call.1} parent=1 // pred_fallthru
      _
    // Predicated region
    $region18: #{tpu_custom_call.1} parent=1 // pred_check
      _
    $region19: #{tpu_custom_call.1} parent=1 // pred_check_branch
      %55 = sbr.rel (0) target = $region21
    $region20: #{tpu_custom_call.1} parent=1 // pred_region
      %57 = dma.done [#allocation3], 8192
    $region21: #{tpu_custom_call.1} parent=1 // pred_fallthru
      _
    // Predicated region
    $region22: #{tpu_custom_call.1} parent=1 // pred_check
      _
    $region23: #{tpu_custom_call.1} parent=1 // pred_check_branch
      %59 = sbr.rel (0) target = $region25
    $region24: #{tpu_custom_call.1} parent=1 // pred_region
      %61 = dma.done [#allocation6], 512
    $region25: #{tpu_custom_call.1} parent=1 // pred_fallthru
      _
    // Predicated region
    $region26: #{tpu_custom_call.1} parent=1 // pred_check
      _
    $region27: #{tpu_custom_call.1} parent=1 // pred_check_branch
      %63 = sbr.rel (0) target = $region29
    $region28: #{tpu_custom_call.1} parent=1 // pred_region
      %65 = dma.done [#allocation6], 512
    $region29: #{tpu_custom_call.1} parent=1 // pred_fallthru
      _
    %v66 = vld [vmem:[#allocation5] sm:$0xff]
    %v67 = vld [vmem:[#allocation5 + $0x8] sm:$0xff]
    %v68 = vld [vmem:[#allocation5 + $0x10] sm:$0xff]
    %v69 = vld [vmem:[#allocation5 + $0x18] sm:$0xff]
    %v70 = vld [vmem:[#allocation2] sm:$0xff]
    %v71 = vld [vmem:[#allocation2 + $0x8] sm:$0xff]
    %v72 = vld [vmem:[#allocation2 + $0x10] sm:$0xff]
    %v73 = vld [vmem:[#allocation2 + $0x18] sm:$0xff]
    %v74 = vld [vmem:[#allocation2 + $0x20] sm:$0xff]
    %v75 = vld [vmem:[#allocation2 + $0x28] sm:$0xff]
    %v76 = vld [vmem:[#allocation2 + $0x30] sm:$0xff]
    %v77 = vld [vmem:[#allocation2 + $0x38] sm:$0xff]
    %v78 = vld [vmem:[#allocation2 + $0x40] sm:$0xff]
    %v79 = vld [vmem:[#allocation2 + $0x48] sm:$0xff]
    %v80 = vld [vmem:[#allocation2 + $0x50] sm:$0xff]
    %v81 = vld [vmem:[#allocation2 + $0x58] sm:$0xff]
    %v82 = vld [vmem:[#allocation2 + $0x60] sm:$0xff]
    %v83 = vld [vmem:[#allocation2 + $0x68] sm:$0xff]
    %v84 = vld [vmem:[#allocation2 + $0x70] sm:$0xff]
    %v85 = vld [vmem:[#allocation2 + $0x78] sm:$0xff]
    %v86 = vld [vmem:[#allocation2 + $0x80] sm:$0xff]
    %v87 = vld [vmem:[#allocation2 + $0x88] sm:$0xff]
    %v88 = vld [vmem:[#allocation2 + $0x90] sm:$0xff]
    %v89 = vld [vmem:[#allocation2 + $0x98] sm:$0xff]
    %v90 = vld [vmem:[#allocation2 + $0xa0] sm:$0xff]
    %v91 = vld [vmem:[#allocation2 + $0xa8] sm:$0xff]
    %v92 = vld [vmem:[#allocation2 + $0xb0] sm:$0xff]
    %v93 = vld [vmem:[#allocation2 + $0xb8] sm:$0xff]
    %v94 = vld [vmem:[#allocation2 + $0xc0] sm:$0xff]
    %v95 = vld [vmem:[#allocation2 + $0xc8] sm:$0xff]
    %v96 = vld [vmem:[#allocation2 + $0xd0] sm:$0xff]
    %v97 = vld [vmem:[#allocation2 + $0xd8] sm:$0xff]
    %v98 = vld [vmem:[#allocation2 + $0xe0] sm:$0xff]
    %v99 = vld [vmem:[#allocation2 + $0xe8] sm:$0xff]
    %v100 = vld [vmem:[#allocation2 + $0xf0] sm:$0xff]
    %v101 = vld [vmem:[#allocation2 + $0xf8] sm:$0xff]
    %v102 = vld [vmem:[#allocation2 + $0x100] sm:$0xff]
    %v103 = vld [vmem:[#allocation2 + $0x108] sm:$0xff]
    %v104 = vld [vmem:[#allocation2 + $0x110] sm:$0xff]
    %v105 = vld [vmem:[#allocation2 + $0x118] sm:$0xff]
    %v106 = vld [vmem:[#allocation2 + $0x120] sm:$0xff]
    %v107 = vld [vmem:[#allocation2 + $0x128] sm:$0xff]
    %v108 = vld [vmem:[#allocation2 + $0x130] sm:$0xff]
    %v109 = vld [vmem:[#allocation2 + $0x138] sm:$0xff]
    %v110 = vld [vmem:[#allocation2 + $0x140] sm:$0xff]
    %v111 = vld [vmem:[#allocation2 + $0x148] sm:$0xff]
    %v112 = vld [vmem:[#allocation2 + $0x150] sm:$0xff]
    %v113 = vld [vmem:[#allocation2 + $0x158] sm:$0xff]
    %v114 = vld [vmem:[#allocation2 + $0x160] sm:$0xff]
    %v115 = vld [vmem:[#allocation2 + $0x168] sm:$0xff]
    %v116 = vld [vmem:[#allocation2 + $0x170] sm:$0xff]
    %v117 = vld [vmem:[#allocation2 + $0x178] sm:$0xff]
    %v118 = vld [vmem:[#allocation2 + $0x180] sm:$0xff]
    %v119 = vld [vmem:[#allocation2 + $0x188] sm:$0xff]
    %v120 = vld [vmem:[#allocation2 + $0x190] sm:$0xff]
    %v121 = vld [vmem:[#allocation2 + $0x198] sm:$0xff]
    %v122 = vld [vmem:[#allocation2 + $0x1a0] sm:$0xff]
    %v123 = vld [vmem:[#allocation2 + $0x1a8] sm:$0xff]
    %v124 = vld [vmem:[#allocation2 + $0x1b0] sm:$0xff]
    %v125 = vld [vmem:[#allocation2 + $0x1b8] sm:$0xff]
    %v126 = vld [vmem:[#allocation2 + $0x1c0] sm:$0xff]
    %v127 = vld [vmem:[#allocation2 + $0x1c8] sm:$0xff]
    %v128 = vld [vmem:[#allocation2 + $0x1d0] sm:$0xff]
    %v129 = vld [vmem:[#allocation2 + $0x1d8] sm:$0xff]
    %v130 = vld [vmem:[#allocation2 + $0x1e0] sm:$0xff]
    %v131 = vld [vmem:[#allocation2 + $0x1e8] sm:$0xff]
    %v132 = vld [vmem:[#allocation2 + $0x1f0] sm:$0xff]
    %v133 = vld [vmem:[#allocation2 + $0x1f8] sm:$0xff]
    %134 = vmatpush.msra.mxu0 %v130
    %135 = vmatpush.msra.mxu0 %v126
    %136 = vmatpush.msra.mxu0 %v122
    %137 = vmatpush.msra.mxu0 %v118
    %138 = vmatpush.msra.mxu0 %v114
    %139 = vmatpush.msra.mxu0 %v110
    %140 = vmatpush.msra.mxu0 %v106
    %141 = vmatpush.msra.mxu0 %v102
    %142 = vmatpush.msra.mxu0 %v98
    %143 = vmatpush.msra.mxu0 %v94
    %144 = vmatpush.msra.mxu0 %v90
    %145 = vmatpush.msra.mxu0 %v86
    %146 = vmatpush.msra.mxu0 %v82
    %147 = vmatpush.msra.mxu0 %v78
    %148 = vmatpush.msra.mxu0 %v74
    %149 = vmatpush.msra.mxu0 %v70
    %150 = vmatmul.f32.gmra.mxu0 %v66
    %v151 = vpop.f32.mrf.mxu0
    %v152 = vadd.f32 0.0, %v151
    %153 = vmatmul.f32.gmra.mxu0 %v67
    %v154 = vpop.f32.mrf.mxu0
    %v155 = vadd.f32 0.0, %v154
    %156 = vmatmul.f32.gmra.mxu0 %v68
    %v157 = vpop.f32.mrf.mxu0
    %v158 = vadd.f32 0.0, %v157
    %159 = vmatmul.f32.gmra.mxu0 %v69
    %v160 = vpop.f32.mrf.mxu0
    %v161 = vadd.f32 0.0, %v160
    %162 = vdwg.mxu0
    %163 = vmatpush.msra.mxu0 %v131
    %164 = vmatpush.msra.mxu0 %v127
    %165 = vmatpush.msra.mxu0 %v123
    %166 = vmatpush.msra.mxu0 %v119
    %167 = vmatpush.msra.mxu0 %v115
    %168 = vmatpush.msra.mxu0 %v111
    %169 = vmatpush.msra.mxu0 %v107
    %170 = vmatpush.msra.mxu0 %v103
    %171 = vmatpush.msra.mxu0 %v99
    %172 = vmatpush.msra.mxu0 %v95
    %173 = vmatpush.msra.mxu0 %v91
    %174 = vmatpush.msra.mxu0 %v87
    %175 = vmatpush.msra.mxu0 %v83
    %176 = vmatpush.msra.mxu0 %v79
    %177 = vmatpush.msra.mxu0 %v75
    %178 = vmatpush.msra.mxu0 %v71
    %179 = vmatmul.f32.gmra.mxu0 %v66
    %v180 = vpop.f32.mrf.mxu0
    %v181 = vadd.f32 0.0, %v180
    %182 = vmatmul.f32.gmra.mxu0 %v67
    %v183 = vpop.f32.mrf.mxu0
    %v184 = vadd.f32 0.0, %v183
    %185 = vmatmul.f32.gmra.mxu0 %v68
    %v186 = vpop.f32.mrf.mxu0
    %v187 = vadd.f32 0.0, %v186
    %188 = vmatmul.f32.gmra.mxu0 %v69
    %v189 = vpop.f32.mrf.mxu0
    %v190 = vadd.f32 0.0, %v189
    %191 = vdwg.mxu0
    %192 = vmatpush.msra.mxu0 %v132
    %193 = vmatpush.msra.mxu0 %v128
    %194 = vmatpush.msra.mxu0 %v124
    %195 = vmatpush.msra.mxu0 %v120
    %196 = vmatpush.msra.mxu0 %v116
    %197 = vmatpush.msra.mxu0 %v112
    %198 = vmatpush.msra.mxu0 %v108
    %199 = vmatpush.msra.mxu0 %v104
    %200 = vmatpush.msra.mxu0 %v100
    %201 = vmatpush.msra.mxu0 %v96
    %202 = vmatpush.msra.mxu0 %v92
    %203 = vmatpush.msra.mxu0 %v88
    %204 = vmatpush.msra.mxu0 %v84
    %205 = vmatpush.msra.mxu0 %v80
    %206 = vmatpush.msra.mxu0 %v76
    %207 = vmatpush.msra.mxu0 %v72
    %208 = vmatmul.f32.gmra.mxu0 %v66
    %v209 = vpop.f32.mrf.mxu0
    %v210 = vadd.f32 0.0, %v209
    %211 = vmatmul.f32.gmra.mxu0 %v67
    %v212 = vpop.f32.mrf.mxu0
    %v213 = vadd.f32 0.0, %v212
    %214 = vmatmul.f32.gmra.mxu0 %v68
    %v215 = vpop.f32.mrf.mxu0
    %v216 = vadd.f32 0.0, %v215
    %217 = vmatmul.f32.gmra.mxu0 %v69
    %v218 = vpop.f32.mrf.mxu0
    %v219 = vadd.f32 0.0, %v218
    %220 = vdwg.mxu0
    %221 = vmatpush.msra.mxu0 %v133
    %222 = vmatpush.msra.mxu0 %v129
    %223 = vmatpush.msra.mxu0 %v125
    %224 = vmatpush.msra.mxu0 %v121
    %225 = vmatpush.msra.mxu0 %v117
    %226 = vmatpush.msra.mxu0 %v113
    %227 = vmatpush.msra.mxu0 %v109
    %228 = vmatpush.msra.mxu0 %v105
    %229 = vmatpush.msra.mxu0 %v101
    %230 = vmatpush.msra.mxu0 %v97
    %231 = vmatpush.msra.mxu0 %v93
    %232 = vmatpush.msra.mxu0 %v89
    %233 = vmatpush.msra.mxu0 %v85
    %234 = vmatpush.msra.mxu0 %v81
    %235 = vmatpush.msra.mxu0 %v77
    %236 = vmatpush.msra.mxu0 %v73
    %237 = vmatmul.f32.gmra.mxu0 %v66
    %v238 = vpop.f32.mrf.mxu0
    %v239 = vadd.f32 0.0, %v238
    %240 = vmatmul.f32.gmra.mxu0 %v67
    %v241 = vpop.f32.mrf.mxu0
    %v242 = vadd.f32 0.0, %v241
    %243 = vmatmul.f32.gmra.mxu0 %v68
    %v244 = vpop.f32.mrf.mxu0
    %v245 = vadd.f32 0.0, %v244
    %246 = vmatmul.f32.gmra.mxu0 %v69
    %v247 = vpop.f32.mrf.mxu0
    %v248 = vadd.f32 0.0, %v247
    %249 = vdwg.mxu0
    %v250 = vld [vmem:[%s2] sm:$0xff]
    %v251 = vld [vmem:[%s2 + $0x8] sm:$0xff]
    %s252 = scalar_lea.vmem %s2, 16
    %v253 = vld [vmem:[%s252] sm:$0xff]
    %v254 = vld [vmem:[%s252 + $0x8] sm:$0xff]
    %s255 = scalar_lea.vmem %s2, 32
    %v256 = vld [vmem:[%s255] sm:$0xff]
    %v257 = vld [vmem:[%s255 + $0x8] sm:$0xff]
    %v258 = vld [vmem:[#allocation7] sm:$0xff]
    %v259 = vld [vmem:[#allocation7 + $0x8] sm:$0xff]
    %v260 = vld [vmem:[#allocation7 + $0x10] sm:$0xff]
    %v261 = vld [vmem:[#allocation7 + $0x18] sm:$0xff]
    %v262 = vmul.f32 %v250, %v258
    %v263 = vmul.f32 %v251, %v259
    %v264 = vmul.f32 %v250, %v260
    %v265 = vmul.f32 %v251, %v261
    %v266 = vadd.f32 %v152, %v262
    %v267 = vadd.f32 %v181, %v263
    %v268 = vadd.f32 %v210, %v264
    %v269 = vadd.f32 %v239, %v265
    %v270 = vxor.u32 %v266, 2147483648
    %v271 = vxor.u32 %v267, 2147483648
    %v272 = vxor.u32 %v268, 2147483648
    %v273 = vxor.u32 %v269, 2147483648
    %v274 = vmul.f32 %v270, 1.442695
    %v275 = vpow.pop %v274
    %v276 = vmul.f32 %v271, 1.442695
    %v277 = vpow.pop %v276
    %v278 = vmul.f32 %v272, 1.442695
    %v279 = vpow.pop %v278
    %v280 = vmul.f32 %v273, 1.442695
    %v281 = vpow.pop %v280
    %v282 = vadd.f32 %v275, 1.0
    %v283 = vadd.f32 %v277, 1.0
    %v284 = vadd.f32 %v279, 1.0
    %v285 = vadd.f32 %v281, 1.0
    %v286 = vrcp.pop %v282
    %v287 = vmul.f32 %v282, %v286
    %v288 = vsub.f32 1.0, %v287
    %v289 = vmul.f32 %v286, %v288
    %v290 = vadd.f32 %v286, %v289
    %vm291 = vweird.f32 %v282
    %vm292 = vweird.f32 %v286
    %vm293 = vmor %vm291, %vm292
    %v294 = vsel %vm293, %v286, %v290
    %v295 = vand.u32 2147483647, %v282
    %vm296 = vcmp.eq.f32.partialorder %v295, 8.507059e+37
    %v297 = vand.u32 %v282, 2147483648
    %v298 = vor.u32 1.1754944e-38, %v297
    %v299 = vsel %vm296, %v298, %v294
    %v300 = vmul.f32 1.0, %v299
    %v301 = vrcp.pop %v283
    %v302 = vmul.f32 %v283, %v301
    %v303 = vsub.f32 1.0, %v302
    %v304 = vmul.f32 %v301, %v303
    %v305 = vadd.f32 %v301, %v304
    %vm306 = vweird.f32 %v283
    %vm307 = vweird.f32 %v301
    %vm308 = vmor %vm306, %vm307
    %v309 = vsel %vm308, %v301, %v305
    %v310 = vand.u32 2147483647, %v283
    %vm311 = vcmp.eq.f32.partialorder %v310, 8.507059e+37
    %v312 = vand.u32 %v283, 2147483648
    %v313 = vor.u32 1.1754944e-38, %v312
    %v314 = vsel %vm311, %v313, %v309
    %v315 = vmul.f32 1.0, %v314
    %v316 = vrcp.pop %v284
    %v317 = vmul.f32 %v284, %v316
    %v318 = vsub.f32 1.0, %v317
    %v319 = vmul.f32 %v316, %v318
    %v320 = vadd.f32 %v316, %v319
    %vm321 = vweird.f32 %v284
    %vm322 = vweird.f32 %v316
    %vm323 = vmor %vm321, %vm322
    %v324 = vsel %vm323, %v316, %v320
    %v325 = vand.u32 2147483647, %v284
    %vm326 = vcmp.eq.f32.partialorder %v325, 8.507059e+37
    %v327 = vand.u32 %v284, 2147483648
    %v328 = vor.u32 1.1754944e-38, %v327
    %v329 = vsel %vm326, %v328, %v324
    %v330 = vmul.f32 1.0, %v329
    %v331 = vrcp.pop %v285
    %v332 = vmul.f32 %v285, %v331
    %v333 = vsub.f32 1.0, %v332
    %v334 = vmul.f32 %v331, %v333
    %v335 = vadd.f32 %v331, %v334
    %vm336 = vweird.f32 %v285
    %vm337 = vweird.f32 %v331
    %vm338 = vmor %vm336, %vm337
    %v339 = vsel %vm338, %v331, %v335
    %v340 = vand.u32 2147483647, %v285
    %vm341 = vcmp.eq.f32.partialorder %v340, 8.507059e+37
    %v342 = vand.u32 %v285, 2147483648
    %v343 = vor.u32 1.1754944e-38, %v342
    %v344 = vsel %vm341, %v343, %v339
    %v345 = vmul.f32 1.0, %v344
    %v346 = vmul.f32 %v253, %v258
    %v347 = vmul.f32 %v254, %v259
    %v348 = vmul.f32 %v253, %v260
    %v349 = vmul.f32 %v254, %v261
    %v350 = vadd.f32 %v155, %v346
    %v351 = vadd.f32 %v184, %v347
    %v352 = vadd.f32 %v213, %v348
    %v353 = vadd.f32 %v242, %v349
    %v354 = vxor.u32 %v350, 2147483648
    %v355 = vxor.u32 %v351, 2147483648
    %v356 = vxor.u32 %v352, 2147483648
    %v357 = vxor.u32 %v353, 2147483648
    %v358 = vmul.f32 %v354, 1.442695
    %v359 = vpow.pop %v358
    %v360 = vmul.f32 %v355, 1.442695
    %v361 = vpow.pop %v360
    %v362 = vmul.f32 %v356, 1.442695
    %v363 = vpow.pop %v362
    %v364 = vmul.f32 %v357, 1.442695
    %v365 = vpow.pop %v364
    %v366 = vadd.f32 %v359, 1.0
    %v367 = vadd.f32 %v361, 1.0
    %v368 = vadd.f32 %v363, 1.0
    %v369 = vadd.f32 %v365, 1.0
    %v370 = vrcp.pop %v366
    %v371 = vmul.f32 %v366, %v370
    %v372 = vsub.f32 1.0, %v371
    %v373 = vmul.f32 %v370, %v372
    %v374 = vadd.f32 %v370, %v373
    %vm375 = vweird.f32 %v366
    %vm376 = vweird.f32 %v370
    %vm377 = vmor %vm375, %vm376
    %v378 = vsel %vm377, %v370, %v374
    %v379 = vand.u32 2147483647, %v366
    %vm380 = vcmp.eq.f32.partialorder %v379, 8.507059e+37
    %v381 = vand.u32 %v366, 2147483648
    %v382 = vor.u32 1.1754944e-38, %v381
    %v383 = vsel %vm380, %v382, %v378
    %v384 = vmul.f32 1.0, %v383
    %v385 = vrcp.pop %v367
    %v386 = vmul.f32 %v367, %v385
    %v387 = vsub.f32 1.0, %v386
    %v388 = vmul.f32 %v385, %v387
    %v389 = vadd.f32 %v385, %v388
    %vm390 = vweird.f32 %v367
    %vm391 = vweird.f32 %v385
    %vm392 = vmor %vm390, %vm391
    %v393 = vsel %vm392, %v385, %v389
    %v394 = vand.u32 2147483647, %v367
    %vm395 = vcmp.eq.f32.partialorder %v394, 8.507059e+37
    %v396 = vand.u32 %v367, 2147483648
    %v397 = vor.u32 1.1754944e-38, %v396
    %v398 = vsel %vm395, %v397, %v393
    %v399 = vmul.f32 1.0, %v398
    %v400 = vrcp.pop %v368
    %v401 = vmul.f32 %v368, %v400
    %v402 = vsub.f32 1.0, %v401
    %v403 = vmul.f32 %v400, %v402
    %v404 = vadd.f32 %v400, %v403
    %vm405 = vweird.f32 %v368
    %vm406 = vweird.f32 %v400
    %vm407 = vmor %vm405, %vm406
    %v408 = vsel %vm407, %v400, %v404
    %v409 = vand.u32 2147483647, %v368
    %vm410 = vcmp.eq.f32.partialorder %v409, 8.507059e+37
    %v411 = vand.u32 %v368, 2147483648
    %v412 = vor.u32 1.1754944e-38, %v411
    %v413 = vsel %vm410, %v412, %v408
    %v414 = vmul.f32 1.0, %v413
    %v415 = vrcp.pop %v369
    %v416 = vmul.f32 %v369, %v415
    %v417 = vsub.f32 1.0, %v416
    %v418 = vmul.f32 %v415, %v417
    %v419 = vadd.f32 %v415, %v418
    %vm420 = vweird.f32 %v369
    %vm421 = vweird.f32 %v415
    %vm422 = vmor %vm420, %vm421
    %v423 = vsel %vm422, %v415, %v419
    %v424 = vand.u32 2147483647, %v369
    %vm425 = vcmp.eq.f32.partialorder %v424, 8.507059e+37
    %v426 = vand.u32 %v369, 2147483648
    %v427 = vor.u32 1.1754944e-38, %v426
    %v428 = vsel %vm425, %v427, %v423
    %v429 = vmul.f32 1.0, %v428
    %v430 = vmul.f32 %v384, %v258
    %v431 = vmul.f32 %v399, %v259
    %v432 = vmul.f32 %v414, %v260
    %v433 = vmul.f32 %v429, %v261
    %v434 = vtanh.pop %v158
    %v435 = vtanh.pop %v187
    %v436 = vtanh.pop %v216
    %v437 = vtanh.pop %v245
    %v438 = vmul.f32 %v300, %v434
    %v439 = vmul.f32 %v315, %v435
    %v440 = vmul.f32 %v330, %v436
    %v441 = vmul.f32 %v345, %v437
    %v442 = vadd.f32 %v430, %v438
    %v443 = vadd.f32 %v431, %v439
    %v444 = vadd.f32 %v432, %v440
    %v445 = vadd.f32 %v433, %v441
    %v446 = vmul.f32 %v256, %v442
    %v447 = vmul.f32 %v257, %v443
    %v448 = vmul.f32 %v256, %v444
    %v449 = vmul.f32 %v257, %v445
    %v450 = vadd.f32 %v161, %v446
    %v451 = vadd.f32 %v190, %v447
    %v452 = vadd.f32 %v219, %v448
    %v453 = vadd.f32 %v248, %v449
    %v454 = vxor.u32 %v450, 2147483648
    %v455 = vxor.u32 %v451, 2147483648
    %v456 = vxor.u32 %v452, 2147483648
    %v457 = vxor.u32 %v453, 2147483648
    %v458 = vmul.f32 %v454, 1.442695
    %v459 = vpow.pop %v458
    %v460 = vmul.f32 %v455, 1.442695
    %v461 = vpow.pop %v460
    %v462 = vmul.f32 %v456, 1.442695
    %v463 = vpow.pop %v462
    %v464 = vmul.f32 %v457, 1.442695
    %v465 = vpow.pop %v464
    %v466 = vadd.f32 %v459, 1.0
    %v467 = vadd.f32 %v461, 1.0
    %v468 = vadd.f32 %v463, 1.0
    %v469 = vadd.f32 %v465, 1.0
    %v470 = vrcp.pop %v466
    %v471 = vmul.f32 %v466, %v470
    %v472 = vsub.f32 1.0, %v471
    %v473 = vmul.f32 %v470, %v472
    %v474 = vadd.f32 %v470, %v473
    %vm475 = vweird.f32 %v466
    %vm476 = vweird.f32 %v470
    %vm477 = vmor %vm475, %vm476
    %v478 = vsel %vm477, %v470, %v474
    %v479 = vand.u32 2147483647, %v466
    %vm480 = vcmp.eq.f32.partialorder %v479, 8.507059e+37
    %v481 = vand.u32 %v466, 2147483648
    %v482 = vor.u32 1.1754944e-38, %v481
    %v483 = vsel %vm480, %v482, %v478
    %v484 = vmul.f32 1.0, %v483
    %v485 = vrcp.pop %v467
    %v486 = vmul.f32 %v467, %v485
    %v487 = vsub.f32 1.0, %v486
    %v488 = vmul.f32 %v485, %v487
    %v489 = vadd.f32 %v485, %v488
    %vm490 = vweird.f32 %v467
    %vm491 = vweird.f32 %v485
    %vm492 = vmor %vm490, %vm491
    %v493 = vsel %vm492, %v485, %v489
    %v494 = vand.u32 2147483647, %v467
    %vm495 = vcmp.eq.f32.partialorder %v494, 8.507059e+37
    %v496 = vand.u32 %v467, 2147483648
    %v497 = vor.u32 1.1754944e-38, %v496
    %v498 = vsel %vm495, %v497, %v493
    %v499 = vmul.f32 1.0, %v498
    %v500 = vrcp.pop %v468
    %v501 = vmul.f32 %v468, %v500
    %v502 = vsub.f32 1.0, %v501
    %v503 = vmul.f32 %v500, %v502
    %v504 = vadd.f32 %v500, %v503
    %vm505 = vweird.f32 %v468
    %vm506 = vweird.f32 %v500
    %vm507 = vmor %vm505, %vm506
    %v508 = vsel %vm507, %v500, %v504
    %v509 = vand.u32 2147483647, %v468
    %vm510 = vcmp.eq.f32.partialorder %v509, 8.507059e+37
    %v511 = vand.u32 %v468, 2147483648
    %v512 = vor.u32 1.1754944e-38, %v511
    %v513 = vsel %vm510, %v512, %v508
    %v514 = vmul.f32 1.0, %v513
    %v515 = vrcp.pop %v469
    %v516 = vmul.f32 %v469, %v515
    %v517 = vsub.f32 1.0, %v516
    %v518 = vmul.f32 %v515, %v517
    %v519 = vadd.f32 %v515, %v518
    %vm520 = vweird.f32 %v469
    %vm521 = vweird.f32 %v515
    %vm522 = vmor %vm520, %vm521
    %v523 = vsel %vm522, %v515, %v519
    %v524 = vand.u32 2147483647, %v469
    %vm525 = vcmp.eq.f32.partialorder %v524, 8.507059e+37
    %v526 = vand.u32 %v469, 2147483648
    %v527 = vor.u32 1.1754944e-38, %v526
    %v528 = vsel %vm525, %v527, %v523
    %v529 = vmul.f32 1.0, %v528
    %v530 = vtanh.pop %v442
    %v531 = vtanh.pop %v443
    %v532 = vtanh.pop %v444
    %v533 = vtanh.pop %v445
    %v534 = vmul.f32 %v484, %v530
    %v535 = vmul.f32 %v499, %v531
    %v536 = vmul.f32 %v514, %v532
    %v537 = vmul.f32 %v529, %v533
    %538 = vst [vmem:[#allocation8] sm:$0xff] %v534
    %539 = vst [vmem:[#allocation8 + $0x8] sm:$0xff] %v535
    %540 = vst [vmem:[#allocation8 + $0x10] sm:$0xff] %v536
    %541 = vst [vmem:[#allocation8 + $0x18] sm:$0xff] %v537
    %542 = vst [vmem:[#allocation9] sm:$0xff] %v442
    %543 = vst [vmem:[#allocation9 + $0x8] sm:$0xff] %v443
    %544 = vst [vmem:[#allocation9 + $0x10] sm:$0xff] %v444
    %545 = vst [vmem:[#allocation9 + $0x18] sm:$0xff] %v445
    // Predicated region
    $region30: #{tpu_custom_call.1} parent=1 // pred_check
      _
    $region31: #{tpu_custom_call.1} parent=1 // pred_check_branch
      %547 = sbr.rel (0) target = $region33
    $region32: #{tpu_custom_call.1} parent=1 // pred_region
      %549 = vsyncadd [#allocation4], 0
      %s551 = sshll.u32 [#allocation8], 4
      %s552 = int_to_ptr.vmem [resolvable:$true] %s551
      %s553 = sshll.u32 %s4, 4
      %s554 = int_to_ptr.hbm [resolvable:$true] %s553
      %556 = dma.vmem_to_hbm [thread:$0]  %s552, 512, %s554, [#allocation4]
    $region33: #{tpu_custom_call.1} parent=1 // pred_fallthru
      _
    // Predicated region
    $region34: #{tpu_custom_call.1} parent=1 // pred_check
      _
    $region35: #{tpu_custom_call.1} parent=1 // pred_check_branch
      %558 = sbr.rel (0) target = $region37
    $region36: #{tpu_custom_call.1} parent=1 // pred_region
      %560 = vsyncadd [#allocation10], 0
      %s562 = sshll.u32 [#allocation9], 4
      %s563 = int_to_ptr.vmem [resolvable:$true] %s562
      %s564 = sshll.u32 %s5, 4
      %s565 = int_to_ptr.hbm [resolvable:$true] %s564
      %567 = dma.vmem_to_hbm [thread:$0]  %s563, 512, %s565, [#allocation10]
    $region37: #{tpu_custom_call.1} parent=1 // pred_fallthru
      _
    // Predicated region
    $region38: #{tpu_custom_call.1} parent=1 // pred_check
      _
    $region39: #{tpu_custom_call.1} parent=1 // pred_check_branch
      %569 = sbr.rel (0) target = $region41
    $region40: #{tpu_custom_call.1} parent=1 // pred_region
      %571 = dma.done [#allocation4], 512
    $region41: #{tpu_custom_call.1} parent=1 // pred_fallthru
      _
    // Predicated region
    $region42: #{tpu_custom_call.1} parent=1 // pred_check
      _
    $region43: #{tpu_custom_call.1} parent=1 // pred_check_branch
      %573 = sbr.rel (0) target = $region45
    $region44: #{tpu_custom_call.1} parent=1 // pred_region
      %575 = dma.done [#allocation10], 512
    $region45: #{tpu_custom_call.1} parent=1 // pred_fallthru
      _
    %576 = vsyncpa [#allocation3], 1
    %577 = vsyncpa [#allocation6], 1
    %578 = vsyncpa [#allocation4], 1
    %579 = vsyncpa [#allocation10], 1

</llo_original>
